<compile_context>
chip_gen: v6e
topology: v6e:2x2x1
jax: 0.10.0
libtpu: 0.0.40
codegen_flags: <defaults>
</compile_context>

<pallas_src>
import jax
import jax.numpy as jnp
from jax.experimental import pallas as pl
from jax.experimental.pallas import tpu as pltpu

LANE = 128      # vreg lane width
SUBLANE = 8     # f32 sublane count


def _round_up(x, m):
    return (x + m - 1) // m * m


def autoencoder_kernel(x_ref,
                       w1_ref, b1_ref,   # encoder layer 1: input_dim -> 2*latent
                       w2_ref, b2_ref,   # encoder layer 2: 2*latent -> latent (lane-padded)
                       w3_ref, b3_ref,   # decoder layer 1: latent (lane-padded) -> 2*latent
                       w4_ref, b4_ref,   # decoder layer 2: 2*latent -> input_dim (lane-padded)
                       recon_ref, z_ref):
    x = x_ref[...]
    io_dtype = x.dtype

    # ---- encoder ----
    h1 = jnp.dot(x, w1_ref[...], preferred_element_type=jnp.float32) + b1_ref[...]
    h1 = jnp.maximum(h1, 0.0).astype(io_dtype)                      # ReLU
    z = jnp.dot(h1, w2_ref[...], preferred_element_type=jnp.float32) + b2_ref[...]

    # ---- decoder ----
    h2 = (jnp.dot(z.astype(io_dtype), w3_ref[...],
                  preferred_element_type=jnp.float32) + b3_ref[...])
    h2 = jnp.maximum(h2, 0.0).astype(io_dtype)                      # ReLU
    recon = jnp.dot(h2, w4_ref[...], preferred_element_type=jnp.float32) + b4_ref[...]

    recon_ref[...] = recon.astype(recon_ref.dtype)
    z_ref[...] = z.astype(z_ref.dtype)


def simple_autoencoder_forward(x, params, *, block_batch=None,
                               vmem_budget_bytes=24 * 1024 * 1024):
    """Fused autoencoder forward pass, tiled over the batch dimension.

    Returns (recon, z) with the same semantics as the PyTorch module.
    """
    B, input_dim = x.shape
    w1, b1, w2, b2, w3, b3, w4, b4 = params
    hidden_dim = w1.shape[1]
    latent_dim = w2.shape[1]

    dtype = x.dtype
    itemsize = jnp.dtype(dtype).itemsize

    # ---- lane-dense output padding (exact: zero weight columns / bias entries) ----
    latent_pad = _round_up(latent_dim, LANE)
    recon_pad = _round_up(input_dim, LANE)
    if latent_pad != latent_dim:
        w2 = jnp.pad(w2, ((0, 0), (0, latent_pad - latent_dim)))
        b2 = jnp.pad(b2, ((0, 0), (0, latent_pad - latent_dim)))
        w3 = jnp.pad(w3, ((0, latent_pad - latent_dim), (0, 0)))
    if recon_pad != input_dim:
        w4 = jnp.pad(w4, ((0, 0), (0, recon_pad - input_dim)))
        b4 = jnp.pad(b4, ((0, 0), (0, recon_pad - input_dim)))

    weights = (w1, b1, w2, b2, w3, b3, w4, b4)
    weight_bytes = sum(int(a.size) * jnp.dtype(a.dtype).itemsize for a in weights)

    # ---- pick the batch tile ----
    # Per-row double-buffered HBM<->VMEM bytes (x in + recon/z out).
    row_bytes = 2 * (input_dim + recon_pad + latent_pad) * itemsize
    b_sub = _round_up(B, SUBLANE)
    if block_batch is None:
        blk = min(1024, max(SUBLANE, vmem_budget_bytes // max(row_bytes, 1)))
        blk = max(SUBLANE, (blk // SUBLANE) * SUBLANE)
        blk = min(blk, b_sub)
        # Prefer >= 2 grid steps so the "parallel" batch axis can shard across
        # v7x's two TensorCores (harmless on v5e/v6e: single TC, loop anyway).
        half = _round_up(pl.cdiv(b_sub, 2), SUBLANE)
        if b_sub >= 2 * SUBLANE and blk > half:
            blk = half
    else:
        blk = max(SUBLANE, (int(block_batch) // SUBLANE) * SUBLANE)
        blk = min(blk, _round_up(B, SUBLANE))

    # Pad the batch up to a multiple of the tile (ragged batches supported).
    B_pad = _round_up(B, blk)
    if B_pad != B:
        x = jnp.pad(x, ((0, B_pad - B), (0, 0)))
    grid = (B_pad // blk,)

    # ---- explicit VMEM budget (double-buffered I/O + resident weights + f32 temps) ----
    est_bytes = (blk * row_bytes                                   # x/recon/z double buffers
                 + 2 * weight_bytes                                # weights (double-buffered)
                 + blk * (2 * hidden_dim + latent_pad + recon_pad) * 4)  # f32 temporaries
    vmem_limit = int(min(max(est_bytes + (4 << 20), 32 << 20), 56 << 20))

    # ---- cost estimate (helps XLA schedule around this mem-bound custom call) ----
    flops = 2 * B_pad * hidden_dim * (input_dim + 2 * latent_pad + recon_pad)
    bytes_accessed = B_pad * (input_dim + recon_pad + latent_pad) * itemsize + weight_bytes

    # Weights / biases are small: replicate full tensors (constant block index =>
    # DMA'd once, resident across all grid steps).
    def rep(shape):
        return pl.BlockSpec(shape, lambda i: (0,) * len(shape))

    in_specs = [
        pl.BlockSpec((blk, input_dim), lambda i: (i, 0)),           # x
        rep((input_dim, hidden_dim)), rep((1, hidden_dim)),          # w1, b1
        rep((hidden_dim, latent_pad)), rep((1, latent_pad)),         # w2, b2
        rep((latent_pad, hidden_dim)), rep((1, hidden_dim)),         # w3, b3
        rep((hidden_dim, recon_pad)), rep((1, recon_pad)),           # w4, b4
    ]
    out_specs = [
        pl.BlockSpec((blk, recon_pad), lambda i: (i, 0)),            # recon (lane-dense)
        pl.BlockSpec((blk, latent_pad), lambda i: (i, 0)),           # z     (lane-dense)
    ]
    out_shape = [
        jax.ShapeDtypeStruct((B_pad, recon_pad), dtype),
        jax.ShapeDtypeStruct((B_pad, latent_pad), dtype),
    ]

    recon_full, z_full = pl.pallas_call(
        autoencoder_kernel,
        grid_spec=pltpu.PrefetchScalarGridSpec(
            num_scalar_prefetch=0,
            grid=grid,
            in_specs=in_specs,
            out_specs=out_specs,
        ),
        out_shape=out_shape,
        compiler_params=pltpu.CompilerParams(
            dimension_semantics=("parallel",),
            vmem_limit_bytes=vmem_limit,
        ),
        cost_estimate=pl.CostEstimate(
            flops=flops, transcendentals=0, bytes_accessed=bytes_accessed),
    )(x, *weights)

    # Strip batch padding and the lane-padding columns (zero by construction).
    recon = recon_full[:B, :input_dim]
    z = z_full[:B, :latent_dim]
    return recon, z


def init_params(key, input_dim, latent_dim, dtype=jnp.float32):
    """Deterministic synthetic parameters (PyTorch-Linear init, stored (in, out))."""
    hidden_dim = latent_dim * 2
    keys = jax.random.split(key, 8)

    def linear(kw, kb, fan_in, fan_out):
        bound = 1.0 / jnp.sqrt(fan_in)
        w = jax.random.uniform(kw, (fan_in, fan_out), dtype, -bound, bound)
        b = jax.random.uniform(kb, (1, fan_out), dtype, -bound, bound)
        return w, b

    w1, b1 = linear(keys[0], keys[1], input_dim, hidden_dim)
    w2, b2 = linear(keys[2], keys[3], hidden_dim, latent_dim)
    w3, b3 = linear(keys[4], keys[5], latent_dim, hidden_dim)
    w4, b4 = linear(keys[6], keys[7], hidden_dim, input_dim)
    return (w1, b1, w2, b2, w3, b3, w4, b4)


def reference_forward(x, params):
    w1, b1, w2, b2, w3, b3, w4, b4 = params
    h1 = jnp.maximum(x @ w1 + b1, 0.0)
    z = h1 @ w2 + b2
    h2 = jnp.maximum(z @ w3 + b3, 0.0)
    recon = h2 @ w4 + b4
    return recon, z


if __name__ == "__main__":
    key = jax.random.PRNGKey(0)
    k_x, k_p, k_x2 = jax.random.split(key, 3)

    batch = 8
    input_dim = 64
    latent_dim = 16

    x = jax.random.normal(k_x, (batch, input_dim), jnp.float32)
    params = init_params(k_p, input_dim, latent_dim)

    recon, z = simple_autoencoder_forward(x, params)
    recon = jax.block_until_ready(recon)
    z = jax.block_until_ready(z)

    recon_ref, z_ref = reference_forward(x, params)
    assert recon.shape == (batch, input_dim) and z.shape == (batch, latent_dim)
    assert jnp.allclose(recon, recon_ref, atol=1e-5, rtol=1e-5)
    assert jnp.allclose(z, z_ref, atol=1e-5, rtol=1e-5)

    # Ragged batch (not a multiple of the tile) exercises the pad-and-slice path.
    x2 = jax.random.normal(k_x2, (10, input_dim), jnp.float32)
    recon2, z2 = simple_autoencoder_forward(x2, params)
    recon2 = jax.block_until_ready(recon2)
    z2 = jax.block_until_ready(z2)
    recon2_ref, z2_ref = reference_forward(x2, params)
    assert recon2.shape == (10, input_dim) and z2.shape == (10, latent_dim)
    assert jnp.allclose(recon2, recon2_ref, atol=1e-5, rtol=1e-5)
    assert jnp.allclose(z2, z2_ref, atol=1e-5, rtol=1e-5)

    print("KERNEL_OK")
</pallas_src>

<mosaic_0001>
module attributes {stable_mosaic.version = 11 : i64} {
  func.func @autoencoder_kernel(%arg0: i32, %arg1: memref<8x64xf32, #tpu.memory_space<vmem>>, %arg2: memref<64x32xf32, #tpu.memory_space<vmem>>, %arg3: memref<1x32xf32, #tpu.memory_space<vmem>>, %arg4: memref<32x128xf32, #tpu.memory_space<vmem>>, %arg5: memref<1x128xf32, #tpu.memory_space<vmem>>, %arg6: memref<128x32xf32, #tpu.memory_space<vmem>>, %arg7: memref<1x32xf32, #tpu.memory_space<vmem>>, %arg8: memref<32x128xf32, #tpu.memory_space<vmem>>, %arg9: memref<1x128xf32, #tpu.memory_space<vmem>>, %arg10: memref<8x128xf32, #tpu.memory_space<vmem>>, %arg11: memref<8x128xf32, #tpu.memory_space<vmem>>) attributes {dimension_semantics = [#tpu.dimension_semantics<parallel>], iteration_bounds = array<i64: 1>, scalar_prefetch = 0 : i64, scratch_operands = 0 : i64, tpu.core_type = #tpu.core_type<tc>, window_params = [{transform_indices = @transform_0, window_bounds = array<i64: 8, 64>}, {pipeline_mode = #tpu.pipeline_mode<synchronous>, transform_indices = @transform_1, window_bounds = array<i64: 64, 32>}, {pipeline_mode = #tpu.pipeline_mode<synchronous>, transform_indices = @transform_2, window_bounds = array<i64: 1, 32>}, {pipeline_mode = #tpu.pipeline_mode<synchronous>, transform_indices = @transform_3, window_bounds = array<i64: 32, 128>}, {pipeline_mode = #tpu.pipeline_mode<synchronous>, transform_indices = @transform_4, window_bounds = array<i64: 1, 128>}, {pipeline_mode = #tpu.pipeline_mode<synchronous>, transform_indices = @transform_5, window_bounds = array<i64: 128, 32>}, {pipeline_mode = #tpu.pipeline_mode<synchronous>, transform_indices = @transform_6, window_bounds = array<i64: 1, 32>}, {pipeline_mode = #tpu.pipeline_mode<synchronous>, transform_indices = @transform_7, window_bounds = array<i64: 32, 128>}, {pipeline_mode = #tpu.pipeline_mode<synchronous>, transform_indices = @transform_8, window_bounds = array<i64: 1, 128>}, {transform_indices = @transform_9, window_bounds = array<i64: 8, 128>}, {transform_indices = @transform_10, window_bounds = array<i64: 8, 128>}]} {
    %c0 = arith.constant 0 : index
    %c0_0 = arith.constant 0 : index
    %0 = vector.load %arg1[%c0, %c0_0] : memref<8x64xf32, #tpu.memory_space<vmem>>, vector<8x64xf32>
    %c0_1 = arith.constant 0 : index
    %c0_2 = arith.constant 0 : index
    %1 = vector.load %arg2[%c0_1, %c0_2] : memref<64x32xf32, #tpu.memory_space<vmem>>, vector<64x32xf32>
    %cst = arith.constant dense<0.000000e+00> : vector<8x32xf32>
    %2 = tpu.matmul %0, %1, %cst {dimension_numbers = #tpu.dot_dimension_numbers<[1], [0], [0], [1], [0, 0, 1, 1], [], []>} : vector<8x64xf32>, vector<64x32xf32>, vector<8x32xf32> -> vector<8x32xf32>
    %c0_3 = arith.constant 0 : index
    %c0_4 = arith.constant 0 : index
    %3 = vector.load %arg3[%c0_3, %c0_4] : memref<1x32xf32, #tpu.memory_space<vmem>>, vector<1x32xf32>
    %4 = vector.broadcast %3 : vector<1x32xf32> to vector<8x32xf32>
    %5 = arith.addf %2, %4 : vector<8x32xf32>
    %cst_5 = arith.constant 0.000000e+00 : f32
    %6 = vector.broadcast %cst_5 : f32 to vector<8x32xf32>
    %7 = arith.maximumf %5, %6 : vector<8x32xf32>
    %c0_6 = arith.constant 0 : index
    %c0_7 = arith.constant 0 : index
    %8 = vector.load %arg4[%c0_6, %c0_7] : memref<32x128xf32, #tpu.memory_space<vmem>>, vector<32x128xf32>
    %cst_8 = arith.constant dense<0.000000e+00> : vector<8x128xf32>
    %9 = tpu.matmul %7, %8, %cst_8 {dimension_numbers = #tpu.dot_dimension_numbers<[1], [0], [0], [1], [0, 0, 1, 1], [], []>} : vector<8x32xf32>, vector<32x128xf32>, vector<8x128xf32> -> vector<8x128xf32>
    %c0_9 = arith.constant 0 : index
    %c0_10 = arith.constant 0 : index
    %10 = vector.load %arg5[%c0_9, %c0_10] : memref<1x128xf32, #tpu.memory_space<vmem>>, vector<1x128xf32>
    %11 = vector.broadcast %10 : vector<1x128xf32> to vector<8x128xf32>
    %12 = arith.addf %9, %11 : vector<8x128xf32>
    %c0_11 = arith.constant 0 : index
    %c0_12 = arith.constant 0 : index
    %13 = vector.load %arg6[%c0_11, %c0_12] : memref<128x32xf32, #tpu.memory_space<vmem>>, vector<128x32xf32>
    %cst_13 = arith.constant dense<0.000000e+00> : vector<8x32xf32>
    %14 = tpu.matmul %12, %13, %cst_13 {dimension_numbers = #tpu.dot_dimension_numbers<[1], [0], [0], [1], [0, 0, 1, 1], [], []>} : vector<8x128xf32>, vector<128x32xf32>, vector<8x32xf32> -> vector<8x32xf32>
    %c0_14 = arith.constant 0 : index
    %c0_15 = arith.constant 0 : index
    %15 = vector.load %arg7[%c0_14, %c0_15] : memref<1x32xf32, #tpu.memory_space<vmem>>, vector<1x32xf32>
    %16 = vector.broadcast %15 : vector<1x32xf32> to vector<8x32xf32>
    %17 = arith.addf %14, %16 : vector<8x32xf32>
    %cst_16 = arith.constant 0.000000e+00 : f32
    %18 = vector.broadcast %cst_16 : f32 to vector<8x32xf32>
    %19 = arith.maximumf %17, %18 : vector<8x32xf32>
    %c0_17 = arith.constant 0 : index
    %c0_18 = arith.constant 0 : index
    %20 = vector.load %arg8[%c0_17, %c0_18] : memref<32x128xf32, #tpu.memory_space<vmem>>, vector<32x128xf32>
    %cst_19 = arith.constant dense<0.000000e+00> : vector<8x128xf32>
    %21 = tpu.matmul %19, %20, %cst_19 {dimension_numbers = #tpu.dot_dimension_numbers<[1], [0], [0], [1], [0, 0, 1, 1], [], []>} : vector<8x32xf32>, vector<32x128xf32>, vector<8x128xf32> -> vector<8x128xf32>
    %c0_20 = arith.constant 0 : index
    %c0_21 = arith.constant 0 : index
    %22 = vector.load %arg9[%c0_20, %c0_21] : memref<1x128xf32, #tpu.memory_space<vmem>>, vector<1x128xf32>
    %23 = vector.broadcast %22 : vector<1x128xf32> to vector<8x128xf32>
    %24 = arith.addf %21, %23 : vector<8x128xf32>
    %c0_22 = arith.constant 0 : index
    %c0_23 = arith.constant 0 : index
    %25 = vector.load %arg10[%c0_22, %c0_23] : memref<8x128xf32, #tpu.memory_space<vmem>>, vector<8x128xf32>
    tpu.vector_store %arg10[%c0_22, %c0_23], %24 {strides = array<i32>} : memref<8x128xf32, #tpu.memory_space<vmem>>, vector<8x128xf32>,
    %c0_24 = arith.constant 0 : index
    %c0_25 = arith.constant 0 : index
    %26 = vector.load %arg11[%c0_24, %c0_25] : memref<8x128xf32, #tpu.memory_space<vmem>>, vector<8x128xf32>
    tpu.vector_store %arg11[%c0_24, %c0_25], %12 {strides = array<i32>} : memref<8x128xf32, #tpu.memory_space<vmem>>, vector<8x128xf32>,
    return
  }
  func.func @transform_0(%arg0: i32) -> (i32, i32) {
    %c0_i32 = arith.constant 0 : i32
    %c0_i32_0 = arith.constant 0 : i32
    return %arg0, %c0_i32 : i32, i32
  }
  func.func @transform_1(%arg0: i32) -> (i32, i32) {
    %c0_i32 = arith.constant 0 : i32
    %c0_i32_0 = arith.constant 0 : i32
    %c0_i32_1 = arith.constant 0 : i32
    return %c0_i32, %c0_i32_0 : i32, i32
  }
  func.func @transform_2(%arg0: i32) -> (i32, i32) {
    %c0_i32 = arith.constant 0 : i32
    %c0_i32_0 = arith.constant 0 : i32
    %c0_i32_1 = arith.constant 0 : i32
    return %c0_i32, %c0_i32_0 : i32, i32
  }
  func.func @transform_3(%arg0: i32) -> (i32, i32) {
    %c0_i32 = arith.constant 0 : i32
    %c0_i32_0 = arith.constant 0 : i32
    %c0_i32_1 = arith.constant 0 : i32
    return %c0_i32, %c0_i32_0 : i32, i32
  }
  func.func @transform_4(%arg0: i32) -> (i32, i32) {
    %c0_i32 = arith.constant 0 : i32
    %c0_i32_0 = arith.constant 0 : i32
    %c0_i32_1 = arith.constant 0 : i32
    return %c0_i32, %c0_i32_0 : i32, i32
  }
  func.func @transform_5(%arg0: i32) -> (i32, i32) {
    %c0_i32 = arith.constant 0 : i32
    %c0_i32_0 = arith.constant 0 : i32
    %c0_i32_1 = arith.constant 0 : i32
    return %c0_i32, %c0_i32_0 : i32, i32
  }
  func.func @transform_6(%arg0: i32) -> (i32, i32) {
    %c0_i32 = arith.constant 0 : i32
    %c0_i32_0 = arith.constant 0 : i32
    %c0_i32_1 = arith.constant 0 : i32
    return %c0_i32, %c0_i32_0 : i32, i32
  }
  func.func @transform_7(%arg0: i32) -> (i32, i32) {
    %c0_i32 = arith.constant 0 : i32
    %c0_i32_0 = arith.constant 0 : i32
    %c0_i32_1 = arith.constant 0 : i32
    return %c0_i32, %c0_i32_0 : i32, i32
  }
  func.func @transform_8(%arg0: i32) -> (i32, i32) {
    %c0_i32 = arith.constant 0 : i32
    %c0_i32_0 = arith.constant 0 : i32
    %c0_i32_1 = arith.constant 0 : i32
    return %c0_i32, %c0_i32_0 : i32, i32
  }
  func.func @transform_9(%arg0: i32) -> (i32, i32) {
    %c0_i32 = arith.constant 0 : i32
    %c0_i32_0 = arith.constant 0 : i32
    return %arg0, %c0_i32 : i32, i32
  }
  func.func @transform_10(%arg0: i32) -> (i32, i32) {
    %c0_i32 = arith.constant 0 : i32
    %c0_i32_0 = arith.constant 0 : i32
    return %arg0, %c0_i32 : i32, i32
  }
}

</mosaic_0001>

<llo_original>
// kernel: tpu_custom_call.1
$region0: #{tpu_custom_call.1}
  #allocation0 [shape = 'u32[]', space=smem, size = 0x4, offset = 0x4, fixed_abs, tag = 'smem constant byte address 0x4 - core index']
  #allocation1 [shape = 'u32[144,128]{1,0:T(1,128)}', space=vmem, size = 0x12000, scoped, tag = 'internal scratch']
  %s0 = inlined_call_operand.vmem [shape: f32[8,64], index: 0, kind: input, shape index: {}]
  %s1 = inlined_call_operand.vmem [shape: f32[64,32], index: 1, kind: input, shape index: {}]
  %s2 = inlined_call_operand.vmem [shape: f32[1,32], index: 2, kind: input, shape index: {}]
  %s3 = inlined_call_operand.vmem [shape: f32[32,128], index: 3, kind: input, shape index: {}]
  %s4 = inlined_call_operand.vmem [shape: f32[1,128], index: 4, kind: input, shape index: {}]
  %s5 = inlined_call_operand.vmem [shape: f32[128,32], index: 5, kind: input, shape index: {}]
  %s6 = inlined_call_operand.vmem [shape: f32[1,32], index: 6, kind: input, shape index: {}]
  %s7 = inlined_call_operand.vmem [shape: f32[32,128], index: 7, kind: input, shape index: {}]
  %s8 = inlined_call_operand.vmem [shape: f32[1,128], index: 8, kind: input, shape index: {}]
  %s9 = inlined_call_operand.hbm [shape: f32[8,128], index: 9, kind: output, shape index: {0}]
  %s10 = inlined_call_operand.hbm [shape: f32[8,128], index: 10, kind: output, shape index: {1}]
  %11 = xla_tuple %s9, %s10
  %s12 = sld [smem:[#allocation0]]
  $region54: #{tpu_custom_call.1} parent=0
    _
  %s14 = ssub.s32 1, %s12
  %s15 = scalar_select 0, %s14, %s12
  $region1: #{tpu_custom_call.1} parent=0
    #allocation2 [shape = 'u8[4096]{0}', space=vmem, size = 0x1000, scoped, tag = 'output window, operand 0, single buffered']
    #allocation3 [shape = 's32[1]{0}', space=sflag, size = 0x4, scoped, tag = 'scoped memory for tpu_custom_call.1']
    #allocation4 [shape = 'u8[4096]{0}', space=vmem, size = 0x1000, scoped, tag = 'output window, operand 1, single buffered']
    #allocation5 [shape = 's32[1]{0}', space=sflag, size = 0x4, scoped, tag = 'scoped memory for tpu_custom_call.1']
    %16 = vsyncpa [#allocation3], 0
    %17 = vsyncpa [#allocation5], 0
    // Predicated region
    $region2: #{tpu_custom_call.1} parent=1 // pred_check
      _
    $region3: #{tpu_custom_call.1} parent=1 // pred_check_branch
      %19 = sbr.rel (0) target = $region5
    $region4: #{tpu_custom_call.1} parent=1 // pred_region
      _
    $region5: #{tpu_custom_call.1} parent=1 // pred_fallthru
      _
    // Predicated region
    $region6: #{tpu_custom_call.1} parent=1 // pred_check
      _
    $region7: #{tpu_custom_call.1} parent=1 // pred_check_branch
      %21 = sbr.rel (0) target = $region9
    $region8: #{tpu_custom_call.1} parent=1 // pred_region
      _
    $region9: #{tpu_custom_call.1} parent=1 // pred_fallthru
      _
    // Predicated region
    $region10: #{tpu_custom_call.1} parent=1 // pred_check
      _
    $region11: #{tpu_custom_call.1} parent=1 // pred_check_branch
      %23 = sbr.rel (0) target = $region13
    $region12: #{tpu_custom_call.1} parent=1 // pred_region
      _
    $region13: #{tpu_custom_call.1} parent=1 // pred_fallthru
      _
    // Predicated region
    $region14: #{tpu_custom_call.1} parent=1 // pred_check
      _
    $region15: #{tpu_custom_call.1} parent=1 // pred_check_branch
      %25 = sbr.rel (0) target = $region17
    $region16: #{tpu_custom_call.1} parent=1 // pred_region
      _
    $region17: #{tpu_custom_call.1} parent=1 // pred_fallthru
      _
    // Predicated region
    $region18: #{tpu_custom_call.1} parent=1 // pred_check
      _
    $region19: #{tpu_custom_call.1} parent=1 // pred_check_branch
      %27 = sbr.rel (0) target = $region21
    $region20: #{tpu_custom_call.1} parent=1 // pred_region
      _
    $region21: #{tpu_custom_call.1} parent=1 // pred_fallthru
      _
    // Predicated region
    $region22: #{tpu_custom_call.1} parent=1 // pred_check
      _
    $region23: #{tpu_custom_call.1} parent=1 // pred_check_branch
      %29 = sbr.rel (0) target = $region25
    $region24: #{tpu_custom_call.1} parent=1 // pred_region
      _
    $region25: #{tpu_custom_call.1} parent=1 // pred_fallthru
      _
    // Predicated region
    $region26: #{tpu_custom_call.1} parent=1 // pred_check
      _
    $region27: #{tpu_custom_call.1} parent=1 // pred_check_branch
      %31 = sbr.rel (0) target = $region29
    $region28: #{tpu_custom_call.1} parent=1 // pred_region
      _
    $region29: #{tpu_custom_call.1} parent=1 // pred_fallthru
      _
    // Predicated region
    $region30: #{tpu_custom_call.1} parent=1 // pred_check
      _
    $region31: #{tpu_custom_call.1} parent=1 // pred_check_branch
      %33 = sbr.rel (0) target = $region33
    $region32: #{tpu_custom_call.1} parent=1 // pred_region
      _
    $region33: #{tpu_custom_call.1} parent=1 // pred_fallthru
      _
    // Predicated region
    $region34: #{tpu_custom_call.1} parent=1 // pred_check
      _
    $region35: #{tpu_custom_call.1} parent=1 // pred_check_branch
      %35 = sbr.rel (0) target = $region37
    $region36: #{tpu_custom_call.1} parent=1 // pred_region
      _
    $region37: #{tpu_custom_call.1} parent=1 // pred_fallthru
      _
    %v36 = vld [vmem:[%s0] sm:$0xff]
    %v37 = vld [vmem:[%s1] sm:$0xff]
    %v38 = vld [vmem:[%s1 + $0x8] sm:$0xff]
    %v39 = vld [vmem:[%s1 + $0x10] sm:$0xff]
    %v40 = vld [vmem:[%s1 + $0x18] sm:$0xff]
    %v41 = vld [vmem:[%s1 + $0x20] sm:$0xff]
    %v42 = vld [vmem:[%s1 + $0x28] sm:$0xff]
    %v43 = vld [vmem:[%s1 + $0x30] sm:$0xff]
    %v44 = vld [vmem:[%s1 + $0x38] sm:$0xff]
    %v45 = vld [vmem:[%s2] sm:$0x1]
    %v47 = vlaneseq
    %v48 = vshrl.u32 %v47, 7
    %v49 = vsub.s32 0, %v48
    %v50 = vrot.slane %v45, %v49
    %vm52 = vcmask 523264
    %v54 = vsel %vm52, %v36, 0
    %56 = vmatprep.subr.mxu0 0.0
    %57 = vmatpush1.msra.mxu0 0.0
    %58 = vmatprep.subr.mxu0 0.0
    %59 = vmatpush1.msra.mxu0 0.0
    %60 = vmatprep.subr.mxu0 0.0
    %61 = vmatpush1.msra.mxu0 0.0
    %62 = vmatprep.subr.mxu0 0.0
    %63 = vmatpush1.msra.mxu0 0.0
    %64 = vmatprep.subr.mxu0 0.0
    %65 = vmatpush1.msra.mxu0 0.0
    %66 = vmatprep.subr.mxu0 0.0
    %67 = vmatpush1.msra.mxu0 0.0
    %68 = vmatprep.subr.mxu0 0.0
    %69 = vmatpush1.msra.mxu0 0.0
    %70 = vmatprep.subr.mxu0 0.0
    %71 = vmatpush1.msra.mxu0 0.0
    %72 = vmatprep.subr.mxu0 0.0
    %73 = vmatpush1.msra.mxu0 %v44
    %74 = vmatprep.subr.mxu0 0.0
    %75 = vmatpush1.msra.mxu0 %v43
    %76 = vmatprep.subr.mxu0 0.0
    %77 = vmatpush1.msra.mxu0 %v42
    %78 = vmatprep.subr.mxu0 0.0
    %79 = vmatpush1.msra.mxu0 %v41
    %80 = vmatprep.subr.mxu0 0.0
    %81 = vmatpush1.msra.mxu0 %v40
    %82 = vmatprep.subr.mxu0 0.0
    %83 = vmatpush1.msra.mxu0 %v39
    %84 = vmatprep.subr.mxu0 0.0
    %85 = vmatpush1.msra.mxu0 %v38
    %86 = vmatprep.subr.mxu0 0.0
    %87 = vmatpush1.msra.mxu0 %v37
    %88 = vmatprep.subr.mxu0 0.0
    %89 = vmatpush2.msra.mxu0 0.0
    %90 = vmatprep.subr.mxu0 0.0
    %91 = vmatpush2.msra.mxu0 0.0
    %92 = vmatprep.subr.mxu0 0.0
    %93 = vmatpush2.msra.mxu0 0.0
    %94 = vmatprep.subr.mxu0 0.0
    %95 = vmatpush2.msra.mxu0 0.0
    %96 = vmatprep.subr.mxu0 0.0
    %97 = vmatpush2.msra.mxu0 0.0
    %98 = vmatprep.subr.mxu0 0.0
    %99 = vmatpush2.msra.mxu0 0.0
    %100 = vmatprep.subr.mxu0 0.0
    %101 = vmatpush2.msra.mxu0 0.0
    %102 = vmatprep.subr.mxu0 0.0
    %103 = vmatpush2.msra.mxu0 0.0
    %104 = vmatprep.subr.mxu0 0.0
    %105 = vmatpush2.msra.mxu0 0.0
    %106 = vmatprep.subr.mxu0 0.0
    %107 = vmatpush2.msra.mxu0 0.0
    %108 = vmatprep.subr.mxu0 0.0
    %109 = vmatpush2.msra.mxu0 0.0
    %110 = vmatprep.subr.mxu0 0.0
    %111 = vmatpush2.msra.mxu0 0.0
    %112 = vmatprep.subr.mxu0 0.0
    %113 = vmatpush2.msra.mxu0 0.0
    %114 = vmatprep.subr.mxu0 0.0
    %115 = vmatpush2.msra.mxu0 0.0
    %116 = vmatprep.subr.mxu0 0.0
    %117 = vmatpush2.msra.mxu0 0.0
    %118 = vmatprep.subr.mxu0 0.0
    %119 = vmatpush2.msra.mxu0 0.0
    %120 = vmatprep.mubr.f32.mxu0 0.0
    %121 = vmatmul.mubr.f32.gmra.mxu0 %v54
    %v122 = vpop.f32.mrf.mxu0
    %v123 = vadd.f32 %v50, %v122
    %v124 = vpop.f32.mrf.mxu0
    %125 = vdwg.mxu0
    %v126 = vmax.f32 %v123, 0.0
    %v127 = vld [vmem:[%s3] sm:$0xff]
    %v128 = vld [vmem:[%s3 + $0x8] sm:$0xff]
    %v129 = vld [vmem:[%s3 + $0x10] sm:$0xff]
    %v130 = vld [vmem:[%s3 + $0x18] sm:$0xff]
    %v131 = vld [vmem:[%s4] sm:$0x1]
    %v133 = vlaneseq
    %v134 = vshrl.u32 %v133, 7
    %v135 = vsub.s32 0, %v134
    %v136 = vrot.slane %v131, %v135
    %vm138 = vcmask 261120
    %v140 = vsel %vm138, %v126, 0
    %142 = vmatprep.subr.mxu0 0.0
    %143 = vmatpush1.msra.mxu0 0.0
    %144 = vmatprep.subr.mxu0 0.0
    %145 = vmatpush1.msra.mxu0 0.0
    %146 = vmatprep.subr.mxu0 0.0
    %147 = vmatpush1.msra.mxu0 0.0
    %148 = vmatprep.subr.mxu0 0.0
    %149 = vmatpush1.msra.mxu0 0.0
    %150 = vmatprep.subr.mxu0 0.0
    %151 = vmatpush1.msra.mxu0 0.0
    %152 = vmatprep.subr.mxu0 0.0
    %153 = vmatpush1.msra.mxu0 0.0
    %154 = vmatprep.subr.mxu0 0.0
    %155 = vmatpush1.msra.mxu0 0.0
    %156 = vmatprep.subr.mxu0 0.0
    %157 = vmatpush1.msra.mxu0 0.0
    %158 = vmatprep.subr.mxu0 0.0
    %159 = vmatpush1.msra.mxu0 0.0
    %160 = vmatprep.subr.mxu0 0.0
    %161 = vmatpush1.msra.mxu0 0.0
    %162 = vmatprep.subr.mxu0 0.0
    %163 = vmatpush1.msra.mxu0 0.0
    %164 = vmatprep.subr.mxu0 0.0
    %165 = vmatpush1.msra.mxu0 0.0
    %166 = vmatprep.subr.mxu0 0.0
    %167 = vmatpush1.msra.mxu0 %v130
    %168 = vmatprep.subr.mxu0 0.0
    %169 = vmatpush1.msra.mxu0 %v129
    %170 = vmatprep.subr.mxu0 0.0
    %171 = vmatpush1.msra.mxu0 %v128
    %172 = vmatprep.subr.mxu0 0.0
    %173 = vmatpush1.msra.mxu0 %v127
    %174 = vmatprep.subr.mxu0 0.0
    %175 = vmatpush2.msra.mxu0 0.0
    %176 = vmatprep.subr.mxu0 0.0
    %177 = vmatpush2.msra.mxu0 0.0
    %178 = vmatprep.subr.mxu0 0.0
    %179 = vmatpush2.msra.mxu0 0.0
    %180 = vmatprep.subr.mxu0 0.0
    %181 = vmatpush2.msra.mxu0 0.0
    %182 = vmatprep.subr.mxu0 0.0
    %183 = vmatpush2.msra.mxu0 0.0
    %184 = vmatprep.subr.mxu0 0.0
    %185 = vmatpush2.msra.mxu0 0.0
    %186 = vmatprep.subr.mxu0 0.0
    %187 = vmatpush2.msra.mxu0 0.0
    %188 = vmatprep.subr.mxu0 0.0
    %189 = vmatpush2.msra.mxu0 0.0
    %190 = vmatprep.subr.mxu0 0.0
    %191 = vmatpush2.msra.mxu0 0.0
    %192 = vmatprep.subr.mxu0 0.0
    %193 = vmatpush2.msra.mxu0 0.0
    %194 = vmatprep.subr.mxu0 0.0
    %195 = vmatpush2.msra.mxu0 0.0
    %196 = vmatprep.subr.mxu0 0.0
    %197 = vmatpush2.msra.mxu0 0.0
    %198 = vmatprep.subr.mxu0 0.0
    %199 = vmatpush2.msra.mxu0 0.0
    %200 = vmatprep.subr.mxu0 0.0
    %201 = vmatpush2.msra.mxu0 0.0
    %202 = vmatprep.subr.mxu0 0.0
    %203 = vmatpush2.msra.mxu0 0.0
    %204 = vmatprep.subr.mxu0 0.0
    %205 = vmatpush2.msra.mxu0 0.0
    %206 = vmatprep.mubr.f32.mxu0 0.0
    %207 = vmatmul.mubr.f32.gmra.mxu0 %v140
    %v208 = vpop.f32.mrf.mxu0
    %v209 = vadd.f32 %v136, %v208
    %v210 = vpop.f32.mrf.mxu0
    %211 = vdwg.mxu0
    %v212 = vld [vmem:[%s5] sm:$0xff]
    %v213 = vld [vmem:[%s5 + $0x8] sm:$0xff]
    %v214 = vld [vmem:[%s5 + $0x10] sm:$0xff]
    %v215 = vld [vmem:[%s5 + $0x18] sm:$0xff]
    %v216 = vld [vmem:[%s5 + $0x20] sm:$0xff]
    %v217 = vld [vmem:[%s5 + $0x28] sm:$0xff]
    %v218 = vld [vmem:[%s5 + $0x30] sm:$0xff]
    %v219 = vld [vmem:[%s5 + $0x38] sm:$0xff]
    %v220 = vld [vmem:[%s5 + $0x40] sm:$0xff]
    %v221 = vld [vmem:[%s5 + $0x48] sm:$0xff]
    %v222 = vld [vmem:[%s5 + $0x50] sm:$0xff]
    %v223 = vld [vmem:[%s5 + $0x58] sm:$0xff]
    %v224 = vld [vmem:[%s5 + $0x60] sm:$0xff]
    %v225 = vld [vmem:[%s5 + $0x68] sm:$0xff]
    %v226 = vld [vmem:[%s5 + $0x70] sm:$0xff]
    %v227 = vld [vmem:[%s5 + $0x78] sm:$0xff]
    %v228 = vld [vmem:[%s6] sm:$0x1]
    %v230 = vlaneseq
    %v231 = vshrl.u32 %v230, 7
    %v232 = vsub.s32 0, %v231
    %v233 = vrot.slane %v228, %v232
    %235 = vmatprep.subr.mxu0 0.0
    %236 = vmatpush1.msra.mxu0 %v227
    %237 = vmatprep.subr.mxu0 0.0
    %238 = vmatpush1.msra.mxu0 %v226
    %239 = vmatprep.subr.mxu0 0.0
    %240 = vmatpush1.msra.mxu0 %v225
    %241 = vmatprep.subr.mxu0 0.0
    %242 = vmatpush1.msra.mxu0 %v224
    %243 = vmatprep.subr.mxu0 0.0
    %244 = vmatpush1.msra.mxu0 %v223
    %245 = vmatprep.subr.mxu0 0.0
    %246 = vmatpush1.msra.mxu0 %v222
    %247 = vmatprep.subr.mxu0 0.0
    %248 = vmatpush1.msra.mxu0 %v221
    %249 = vmatprep.subr.mxu0 0.0
    %250 = vmatpush1.msra.mxu0 %v220
    %251 = vmatprep.subr.mxu0 0.0
    %252 = vmatpush1.msra.mxu0 %v219
    %253 = vmatprep.subr.mxu0 0.0
    %254 = vmatpush1.msra.mxu0 %v218
    %255 = vmatprep.subr.mxu0 0.0
    %256 = vmatpush1.msra.mxu0 %v217
    %257 = vmatprep.subr.mxu0 0.0
    %258 = vmatpush1.msra.mxu0 %v216
    %259 = vmatprep.subr.mxu0 0.0
    %260 = vmatpush1.msra.mxu0 %v215
    %261 = vmatprep.subr.mxu0 0.0
    %262 = vmatpush1.msra.mxu0 %v214
    %263 = vmatprep.subr.mxu0 0.0
    %264 = vmatpush1.msra.mxu0 %v213
    %265 = vmatprep.subr.mxu0 0.0
    %266 = vmatpush1.msra.mxu0 %v212
    %267 = vmatprep.subr.mxu0 0.0
    %268 = vmatpush2.msra.mxu0 0.0
    %269 = vmatprep.subr.mxu0 0.0
    %270 = vmatpush2.msra.mxu0 0.0
    %271 = vmatprep.subr.mxu0 0.0
    %272 = vmatpush2.msra.mxu0 0.0
    %273 = vmatprep.subr.mxu0 0.0
    %274 = vmatpush2.msra.mxu0 0.0
    %275 = vmatprep.subr.mxu0 0.0
    %276 = vmatpush2.msra.mxu0 0.0
    %277 = vmatprep.subr.mxu0 0.0
    %278 = vmatpush2.msra.mxu0 0.0
    %279 = vmatprep.subr.mxu0 0.0
    %280 = vmatpush2.msra.mxu0 0.0
    %281 = vmatprep.subr.mxu0 0.0
    %282 = vmatpush2.msra.mxu0 0.0
    %283 = vmatprep.subr.mxu0 0.0
    %284 = vmatpush2.msra.mxu0 0.0
    %285 = vmatprep.subr.mxu0 0.0
    %286 = vmatpush2.msra.mxu0 0.0
    %287 = vmatprep.subr.mxu0 0.0
    %288 = vmatpush2.msra.mxu0 0.0
    %289 = vmatprep.subr.mxu0 0.0
    %290 = vmatpush2.msra.mxu0 0.0
    %291 = vmatprep.subr.mxu0 0.0
    %292 = vmatpush2.msra.mxu0 0.0
    %293 = vmatprep.subr.mxu0 0.0
    %294 = vmatpush2.msra.mxu0 0.0
    %295 = vmatprep.subr.mxu0 0.0
    %296 = vmatpush2.msra.mxu0 0.0
    %297 = vmatprep.subr.mxu0 0.0
    %298 = vmatpush2.msra.mxu0 0.0
    %299 = vmatprep.mubr.f32.mxu0 0.0
    %300 = vmatmul.mubr.f32.gmra.mxu0 %v209
    %v301 = vpop.f32.mrf.mxu0
    %v302 = vadd.f32 %v233, %v301
    %v303 = vpop.f32.mrf.mxu0
    %304 = vdwg.mxu0
    %v305 = vmax.f32 %v302, 0.0
    %v306 = vld [vmem:[%s7] sm:$0xff]
    %v307 = vld [vmem:[%s7 + $0x8] sm:$0xff]
    %v308 = vld [vmem:[%s7 + $0x10] sm:$0xff]
    %v309 = vld [vmem:[%s7 + $0x18] sm:$0xff]
    %v310 = vld [vmem:[%s8] sm:$0x1]
    %v312 = vlaneseq
    %v313 = vshrl.u32 %v312, 7
    %v314 = vsub.s32 0, %v313
    %v315 = vrot.slane %v310, %v314
    %v318 = vsel %vm138, %v305, 0
    %320 = vmatprep.subr.mxu0 0.0
    %321 = vmatpush1.msra.mxu0 0.0
    %322 = vmatprep.subr.mxu0 0.0
    %323 = vmatpush1.msra.mxu0 0.0
    %324 = vmatprep.subr.mxu0 0.0
    %325 = vmatpush1.msra.mxu0 0.0
    %326 = vmatprep.subr.mxu0 0.0
    %327 = vmatpush1.msra.mxu0 0.0
    %328 = vmatprep.subr.mxu0 0.0
    %329 = vmatpush1.msra.mxu0 0.0
    %330 = vmatprep.subr.mxu0 0.0
    %331 = vmatpush1.msra.mxu0 0.0
    %332 = vmatprep.subr.mxu0 0.0
    %333 = vmatpush1.msra.mxu0 0.0
    %334 = vmatprep.subr.mxu0 0.0
    %335 = vmatpush1.msra.mxu0 0.0
    %336 = vmatprep.subr.mxu0 0.0
    %337 = vmatpush1.msra.mxu0 0.0
    %338 = vmatprep.subr.mxu0 0.0
    %339 = vmatpush1.msra.mxu0 0.0
    %340 = vmatprep.subr.mxu0 0.0
    %341 = vmatpush1.msra.mxu0 0.0
    %342 = vmatprep.subr.mxu0 0.0
    %343 = vmatpush1.msra.mxu0 0.0
    %344 = vmatprep.subr.mxu0 0.0
    %345 = vmatpush1.msra.mxu0 %v309
    %346 = vmatprep.subr.mxu0 0.0
    %347 = vmatpush1.msra.mxu0 %v308
    %348 = vmatprep.subr.mxu0 0.0
    %349 = vmatpush1.msra.mxu0 %v307
    %350 = vmatprep.subr.mxu0 0.0
    %351 = vmatpush1.msra.mxu0 %v306
    %352 = vmatprep.subr.mxu0 0.0
    %353 = vmatpush2.msra.mxu0 0.0
    %354 = vmatprep.subr.mxu0 0.0
    %355 = vmatpush2.msra.mxu0 0.0
    %356 = vmatprep.subr.mxu0 0.0
    %357 = vmatpush2.msra.mxu0 0.0
    %358 = vmatprep.subr.mxu0 0.0
    %359 = vmatpush2.msra.mxu0 0.0
    %360 = vmatprep.subr.mxu0 0.0
    %361 = vmatpush2.msra.mxu0 0.0
    %362 = vmatprep.subr.mxu0 0.0
    %363 = vmatpush2.msra.mxu0 0.0
    %364 = vmatprep.subr.mxu0 0.0
    %365 = vmatpush2.msra.mxu0 0.0
    %366 = vmatprep.subr.mxu0 0.0
    %367 = vmatpush2.msra.mxu0 0.0
    %368 = vmatprep.subr.mxu0 0.0
    %369 = vmatpush2.msra.mxu0 0.0
    %370 = vmatprep.subr.mxu0 0.0
    %371 = vmatpush2.msra.mxu0 0.0
    %372 = vmatprep.subr.mxu0 0.0
    %373 = vmatpush2.msra.mxu0 0.0
    %374 = vmatprep.subr.mxu0 0.0
    %375 = vmatpush2.msra.mxu0 0.0
    %376 = vmatprep.subr.mxu0 0.0
    %377 = vmatpush2.msra.mxu0 0.0
    %378 = vmatprep.subr.mxu0 0.0
    %379 = vmatpush2.msra.mxu0 0.0
    %380 = vmatprep.subr.mxu0 0.0
    %381 = vmatpush2.msra.mxu0 0.0
    %382 = vmatprep.subr.mxu0 0.0
    %383 = vmatpush2.msra.mxu0 0.0
    %384 = vmatprep.mubr.f32.mxu0 0.0
    %385 = vmatmul.mubr.f32.gmra.mxu0 %v318
    %v386 = vpop.f32.mrf.mxu0
    %v387 = vadd.f32 %v315, %v386
    %v388 = vpop.f32.mrf.mxu0
    %389 = vdwg.mxu0
    %390 = vst [vmem:[#allocation2] sm:$0xff] %v387
    %391 = vst [vmem:[#allocation4] sm:$0xff] %v209
    // Predicated region
    $region38: #{tpu_custom_call.1} parent=1 // pred_check
      _
    $region39: #{tpu_custom_call.1} parent=1 // pred_check_branch
      %393 = sbr.rel (0) target = $region41
    $region40: #{tpu_custom_call.1} parent=1 // pred_region
      %s395 = ssub.s32 128, 128
      %396 = vsyncadd [#allocation3], %s395
      %s398 = sshll.u32 [#allocation2], 4
      %s399 = int_to_ptr.vmem [resolvable:$true] %s398
      %401 = dma.vmem_to_hbm [thread:$0]  %s399, 128, %s9, [#allocation3]
    $region41: #{tpu_custom_call.1} parent=1 // pred_fallthru
      _
    // Predicated region
    $region42: #{tpu_custom_call.1} parent=1 // pred_check
      _
    $region43: #{tpu_custom_call.1} parent=1 // pred_check_branch
      %403 = sbr.rel (0) target = $region45
    $region44: #{tpu_custom_call.1} parent=1 // pred_region
      %s405 = ssub.s32 128, 128
      %406 = vsyncadd [#allocation5], %s405
      %s408 = sshll.u32 [#allocation4], 4
      %s409 = int_to_ptr.vmem [resolvable:$true] %s408
      %411 = dma.vmem_to_hbm [thread:$0]  %s409, 128, %s10, [#allocation5]
    $region45: #{tpu_custom_call.1} parent=1 // pred_fallthru
      _
    // Predicated region
    $region46: #{tpu_custom_call.1} parent=1 // pred_check
      _
    $region47: #{tpu_custom_call.1} parent=1 // pred_check_branch
      %413 = sbr.rel (0) target = $region49
    $region48: #{tpu_custom_call.1} parent=1 // pred_region
      %414 = dma.done [#allocation3], 128
    $region49: #{tpu_custom_call.1} parent=1 // pred_fallthru
      _
    // Predicated region
    $region50: #{tpu_custom_call.1} parent=1 // pred_check
      _
    $region51: #{tpu_custom_call.1} parent=1 // pred_check_branch
      %416 = sbr.rel (0) target = $region53
    $region52: #{tpu_custom_call.1} parent=1 // pred_region
      %417 = dma.done [#allocation5], 128
    $region53: #{tpu_custom_call.1} parent=1 // pred_fallthru
      _
    %418 = vsyncpa [#allocation3], 1
    %419 = vsyncpa [#allocation5], 1

</llo_original>
